<compile_context>
chip_gen: v5e
topology: v5e:2x2
jax: 0.10.0
libtpu: 0.0.40
codegen_flags: <defaults>
</compile_context>

<pallas_src>
import functools

import jax
import jax.numpy as jnp
from jax import lax
from jax.experimental import pallas as pl
from jax.experimental.pallas import tpu as pltpu

P_DROP = 0.1
_KEEP_SCALE = 1.0 / (1.0 - P_DROP)
# Signed-int32 threshold: keep an element iff its hashed int32 bits are >= this value.
# P(keep) = (2**32 - round(P_DROP * 2**32)) / 2**32 = 1 - P_DROP (up to 2**-32).
_KEEP_THRESHOLD = -(2 ** 31) + int(round(P_DROP * (2 ** 32)))


def _srl(x, k):
    """Logical right shift for int32 (jnp's >> is arithmetic for signed types)."""
    return (x >> k) & ((1 << (32 - k)) - 1)


def _mix32(x):
    """murmur3 fmix32 finalizer on int32 (wrapping multiplies). Strong avalanche."""
    x = x ^ _srl(x, 16)
    x = x * (-2048144789)   # 0x85ebca6b as int32
    x = x ^ _srl(x, 13)
    x = x * (-1028477387)   # 0xc2b2ae35 as int32
    x = x ^ _srl(x, 16)
    return x


def _embed_kernel(seed_sref, ids_ref, tab_ref, pos_ref, out_ref, *, tile, seq_len, vocab):
    """One grid step = `tile` flattened (batch*seq) rows.

    seed_sref : (1,) int32 SMEM (scalar prefetch) dropout seed
    ids_ref   : (tile, 1) int32 VMEM token ids for this tile
    tab_ref   : (V, D) f32 VMEM, resident across the grid (single-buffered)
    pos_ref   : (S, D) f32 VMEM, resident across the grid (single-buffered)
    out_ref   : (tile, D) f32 VMEM output tile (lane-dense for D multiple of 128)
    """
    t = pl.program_id(0)
    d_model = out_ref.shape[-1]

    # ---- token embedding gather: one-hot (tile, V) x table (V, D) on the (idle) MXU ----
    # 0/1 values are exact, f32 accumulation -> effectively an exact row gather.
    ids = ids_ref[...]                                                # (tile, 1) int32
    vocab_iota = lax.broadcasted_iota(jnp.int32, (tile, vocab), 1)    # (tile, V)
    onehot = jnp.where(ids == vocab_iota, 1.0, 0.0)                   # (tile, V) f32
    tok = jnp.dot(onehot, tab_ref[...], preferred_element_type=jnp.float32)  # (tile, D)

    # ---- positional encoding for this tile (pos table fully VMEM-resident) ----
    if tile == seq_len:
        pos_tile = pos_ref[...]
    elif tile < seq_len:                       # tile divides seq_len
        n_blk = seq_len // tile
        off = pl.multiple_of((t % n_blk) * tile, tile)
        pos_tile = pos_ref[pl.ds(off, tile), :]
    else:                                      # tile is a multiple of seq_len
        reps = tile // seq_len
        pos_tile = jnp.concatenate([pos_ref[...]] * reps, axis=0)

    val = tok + pos_tile

    # ---- dropout p=0.1 (training-mode semantics, as in the reference forward) ----
    # Counter-based hash of the global element index: mask is independent of the tiling,
    # reproducible, and needs no TPU-only PRNG primitives.
    seed_h = _mix32(seed_sref[0] * (-1640531535))                     # golden-ratio mix
    row = lax.broadcasted_iota(jnp.int32, (tile, d_model), 0) + t * tile
    col = lax.broadcasted_iota(jnp.int32, (tile, d_model), 1)
    bits = _mix32((row * d_model + col) ^ seed_h)                     # ~uniform int32
    keep = bits >= _KEEP_THRESHOLD
    out_ref[...] = jnp.where(keep, val * _KEEP_SCALE, 0.0).astype(out_ref.dtype)


def _pick_tile(total_rows, seq_len, max_tile):
    """Largest row tile (multiple of 8, <= max_tile) dividing batch*seq that is compatible
    with the resident positional table (tile divides S, or tile is a multiple of an
    8-aligned S).  Prefers a tile leaving >= 2 grid steps so both v7x TCs get work."""
    cands = []
    for c in range(8, min(max_tile, total_rows) + 1, 8):
        if total_rows % c:
            continue
        if seq_len % c == 0 or (c % seq_len == 0 and seq_len % 8 == 0):
            cands.append(c)
    if not cands:
        raise ValueError(
            f"No valid row tile for batch*seq={total_rows}, seq={seq_len}; "
            "batch*seq must be a multiple of 8.")
    multi = [c for c in cands if total_rows // c >= 2]
    return max(multi) if multi else max(cands)


def _vmem_limit_bytes(wanted_bytes):
    """Request enough scoped VMEM, capped at ~85% of physical per-core VMEM."""
    try:
        cap = pltpu.get_tpu_info().vmem_capacity_bytes
    except Exception:
        cap = 64 << 20            # conservative: v7x per-TensorCore VMEM
    return int(min(max(wanted_bytes, 32 << 20), int(cap * 0.85)))


@functools.partial(jax.jit, static_argnames=("max_tile",))
def transformer_embedding(x, token_table, pos_table, seed, max_tile=512):
    """x: (B, S) int token ids -> (B, S, D) f32 = dropout(token_emb(x) + pos_emb[:S])."""
    B, S = x.shape
    V, D = token_table.shape
    total = B * S
    tile = _pick_tile(total, S, max_tile)
    n_tiles = total // tile

    ids = x.reshape(total, 1).astype(jnp.int32)
    seed_arr = jnp.reshape(jnp.asarray(seed, jnp.int32), (1,))
    tab = token_table.astype(jnp.float32)
    pos = pos_table[:S, :].astype(jnp.float32)       # (S, D): NOT tiled over batch

    # VMEM budget: 1x resident table + 1x resident pos + pipelined ids/out tiles
    # + one-hot / iota temporaries, plus headroom.
    wanted = (V * D * 4) + (S * D * 4) + 8 * tile * D * 4 \
        + 4 * tile * max(V, 128) * 4 + (4 << 20)
    vmem_limit = _vmem_limit_bytes(wanted)

    grid_spec = pltpu.PrefetchScalarGridSpec(
        num_scalar_prefetch=1,                       # only the dropout seed lives in SMEM
        grid=(n_tiles,),
        in_specs=[
            # Per-tile token ids (VMEM block, pipelined with the grid).
            pl.BlockSpec((tile, 1), lambda t, seed: (t, 0)),
            # Token table: VMEM-resident across the grid, single-buffered.
            pl.BlockSpec((V, D), lambda t, seed: (0, 0), pipeline_mode=pl.Buffered(1)),
            # Positional table: VMEM-resident (S, D), sliced in-kernel.
            pl.BlockSpec((S, D), lambda t, seed: (0, 0), pipeline_mode=pl.Buffered(1)),
        ],
        out_specs=pl.BlockSpec((tile, D), lambda t, seed: (t, 0)),
    )

    out_flat = pl.pallas_call(
        functools.partial(_embed_kernel, tile=tile, seq_len=S, vocab=V),
        out_shape=jax.ShapeDtypeStruct((total, D), jnp.float32),
        grid_spec=grid_spec,
        compiler_params=pltpu.CompilerParams(
            dimension_semantics=("parallel",),       # row tiles are independent
            vmem_limit_bytes=vmem_limit,
        ),
    )(seed_arr, ids, tab, pos)

    return out_flat.reshape(B, S, D)


def make_sinusoidal_pos_table(max_len, d_model):
    """Standard transformer sinusoidal positional encoding (max_len, d_model)."""
    pos = jnp.arange(max_len, dtype=jnp.float32)[:, None]
    i = jnp.arange(0, d_model, 2, dtype=jnp.float32)
    inv_freq = jnp.exp(-(jnp.log(10000.0) / d_model) * i)
    pe = jnp.zeros((max_len, d_model), dtype=jnp.float32)
    pe = pe.at[:, 0::2].set(jnp.sin(pos * inv_freq))
    pe = pe.at[:, 1::2].set(jnp.cos(pos * inv_freq))
    return pe


if __name__ == "__main__":
    # Small shapes consistent with the module (d_model=128 keeps the output lane-dense).
    vocab_size, d_model, max_len = 64, 128, 16
    batch, seq_len = 2, 8

    key = jax.random.PRNGKey(0)
    k_ids, k_emb = jax.random.split(key)

    # nn.Embedding-style init ~ N(0, 1); padding_idx=1 row zeroed (as in TokenEmbeding).
    token_table = jax.random.normal(k_emb, (vocab_size, d_model), dtype=jnp.float32)
    token_table = token_table.at[1, :].set(0.0)
    pos_table = make_sinusoidal_pos_table(max_len, d_model)
    x = jax.random.randint(k_ids, (batch, seq_len), 0, vocab_size, dtype=jnp.int32)

    out = transformer_embedding(x, token_table, pos_table, seed=1234)
    out = jax.block_until_ready(out)

    assert out.shape == (batch, seq_len, d_model) and out.dtype == jnp.float32
    assert bool(jnp.isfinite(out).all())

    # Sanity: every element is either dropped (exactly 0) or ~ (token_emb + pos)/(1-p).
    ref = token_table[x] + pos_table[:seq_len][None, :, :]
    scaled = ref * _KEEP_SCALE
    mismatch = jnp.minimum(jnp.abs(out), jnp.abs(out - scaled))
    assert bool(jnp.all(mismatch <= 3e-2 * jnp.maximum(1.0, jnp.abs(scaled))))
    # Dropout-rate sanity (p = 0.1 over batch*seq*d_model elements).
    zero_frac = float(jnp.mean(out == 0.0))
    assert 0.02 <= zero_frac <= 0.30, zero_frac

    print("KERNEL_OK")
</pallas_src>

<mosaic_0001>
module attributes {stable_mosaic.version = 11 : i64} {
  func.func @_embed_kernel(%arg0: i32, %arg1: memref<1xi32, #tpu.memory_space<smem>>, %arg2: memref<8x1xi32, #tpu.memory_space<vmem>>, %arg3: memref<64x128xf32, #tpu.memory_space<vmem>>, %arg4: memref<8x128xf32, #tpu.memory_space<vmem>>, %arg5: memref<8x128xf32, #tpu.memory_space<vmem>>) attributes {dimension_semantics = [#tpu.dimension_semantics<parallel>], iteration_bounds = array<i64: 2>, scalar_prefetch = 1 : i64, scratch_operands = 0 : i64, tpu.core_type = #tpu.core_type<tc>, window_params = [{transform_indices = @transform_0, window_bounds = array<i64: 8, 1>}, {pipeline_mode = #tpu.pipeline_mode<synchronous>, transform_indices = @transform_1, window_bounds = array<i64: 64, 128>}, {pipeline_mode = #tpu.pipeline_mode<synchronous>, transform_indices = @transform_2, window_bounds = array<i64: 8, 128>}, {transform_indices = @transform_3, window_bounds = array<i64: 8, 128>}]} {
    %c0 = arith.constant 0 : index
    %c0_0 = arith.constant 0 : index
    %0 = vector.load %arg2[%c0, %c0_0] : memref<8x1xi32, #tpu.memory_space<vmem>>, vector<8x1xi32>
    %1 = tpu.iota {dimensions = array<i32: 1>} : vector<8x64xi32>
    %2 = vector.broadcast %0 : vector<8x1xi32> to vector<8x64xi32>
    %3 = arith.cmpi eq, %2, %1 : vector<8x64xi32>
    %cst = arith.constant 1.000000e+00 : f32
    %cst_1 = arith.constant 0.000000e+00 : f32
    %4 = vector.broadcast %cst : f32 to vector<8x64xf32>
    %5 = vector.broadcast %cst_1 : f32 to vector<8x64xf32>
    %6 = arith.select %3, %4, %5 : vector<8x64xi1>, vector<8x64xf32>
    %c0_2 = arith.constant 0 : index
    %c0_3 = arith.constant 0 : index
    %7 = vector.load %arg3[%c0_2, %c0_3] : memref<64x128xf32, #tpu.memory_space<vmem>>, vector<64x128xf32>
    %cst_4 = arith.constant dense<0.000000e+00> : vector<8x128xf32>
    %8 = tpu.matmul %6, %7, %cst_4 {dimension_numbers = #tpu.dot_dimension_numbers<[1], [0], [0], [1], [0, 0, 1, 1], [], []>} : vector<8x64xf32>, vector<64x128xf32>, vector<8x128xf32> -> vector<8x128xf32>
    %c0_5 = arith.constant 0 : index
    %c0_6 = arith.constant 0 : index
    %9 = vector.load %arg4[%c0_5, %c0_6] : memref<8x128xf32, #tpu.memory_space<vmem>>, vector<8x128xf32>
    %10 = arith.addf %8, %9 : vector<8x128xf32>
    %c0_7 = arith.constant 0 : index
    %11 = memref.load %arg1[%c0_7] : memref<1xi32, #tpu.memory_space<smem>>
    %c-1640531535_i32 = arith.constant -1640531535 : i32
    %12 = arith.muli %11, %c-1640531535_i32 : i32
    %c16_i32 = arith.constant 16 : i32
    %13 = arith.shrsi %12, %c16_i32 : i32
    %c65535_i32 = arith.constant 65535 : i32
    %14 = arith.andi %13, %c65535_i32 : i32
    %15 = arith.xori %12, %14 : i32
    %c-2048144789_i32 = arith.constant -2048144789 : i32
    %16 = arith.muli %15, %c-2048144789_i32 : i32
    %c13_i32 = arith.constant 13 : i32
    %17 = arith.shrsi %16, %c13_i32 : i32
    %c524287_i32 = arith.constant 524287 : i32
    %18 = arith.andi %17, %c524287_i32 : i32
    %19 = arith.xori %16, %18 : i32
    %c-1028477387_i32 = arith.constant -1028477387 : i32
    %20 = arith.muli %19, %c-1028477387_i32 : i32
    %c16_i32_8 = arith.constant 16 : i32
    %21 = arith.shrsi %20, %c16_i32_8 : i32
    %c65535_i32_9 = arith.constant 65535 : i32
    %22 = arith.andi %21, %c65535_i32_9 : i32
    %23 = arith.xori %20, %22 : i32
    %24 = tpu.iota {dimensions = array<i32: 0>} : vector<8x128xi32>
    %c8_i32 = arith.constant 8 : i32
    %25 = arith.muli %arg0, %c8_i32 : i32
    %26 = vector.broadcast %25 : i32 to vector<8x128xi32>
    %27 = arith.addi %24, %26 : vector<8x128xi32>
    %28 = tpu.iota {dimensions = array<i32: 1>} : vector<8x128xi32>
    %c128_i32 = arith.constant 128 : i32
    %29 = vector.broadcast %c128_i32 : i32 to vector<8x128xi32>
    %30 = arith.muli %27, %29 : vector<8x128xi32>
    %31 = arith.addi %30, %28 : vector<8x128xi32>
    %32 = vector.broadcast %23 : i32 to vector<8x128xi32>
    %33 = arith.xori %31, %32 : vector<8x128xi32>
    %c16_i32_10 = arith.constant 16 : i32
    %34 = vector.broadcast %c16_i32_10 : i32 to vector<8x128xi32>
    %35 = arith.shrsi %33, %34 : vector<8x128xi32>
    %c65535_i32_11 = arith.constant 65535 : i32
    %36 = vector.broadcast %c65535_i32_11 : i32 to vector<8x128xi32>
    %37 = arith.andi %35, %36 : vector<8x128xi32>
    %38 = arith.xori %33, %37 : vector<8x128xi32>
    %c-2048144789_i32_12 = arith.constant -2048144789 : i32
    %39 = vector.broadcast %c-2048144789_i32_12 : i32 to vector<8x128xi32>
    %40 = arith.muli %38, %39 : vector<8x128xi32>
    %c13_i32_13 = arith.constant 13 : i32
    %41 = vector.broadcast %c13_i32_13 : i32 to vector<8x128xi32>
    %42 = arith.shrsi %40, %41 : vector<8x128xi32>
    %c524287_i32_14 = arith.constant 524287 : i32
    %43 = vector.broadcast %c524287_i32_14 : i32 to vector<8x128xi32>
    %44 = arith.andi %42, %43 : vector<8x128xi32>
    %45 = arith.xori %40, %44 : vector<8x128xi32>
    %c-1028477387_i32_15 = arith.constant -1028477387 : i32
    %46 = vector.broadcast %c-1028477387_i32_15 : i32 to vector<8x128xi32>
    %47 = arith.muli %45, %46 : vector<8x128xi32>
    %c16_i32_16 = arith.constant 16 : i32
    %48 = vector.broadcast %c16_i32_16 : i32 to vector<8x128xi32>
    %49 = arith.shrsi %47, %48 : vector<8x128xi32>
    %c65535_i32_17 = arith.constant 65535 : i32
    %50 = vector.broadcast %c65535_i32_17 : i32 to vector<8x128xi32>
    %51 = arith.andi %49, %50 : vector<8x128xi32>
    %52 = arith.xori %47, %51 : vector<8x128xi32>
    %c-1717986918_i32 = arith.constant -1717986918 : i32
    %53 = vector.broadcast %c-1717986918_i32 : i32 to vector<8x128xi32>
    %54 = arith.cmpi sge, %52, %53 : vector<8x128xi32>
    %cst_18 = arith.constant 1.11111116 : f32
    %55 = vector.broadcast %cst_18 : f32 to vector<8x128xf32>
    %56 = arith.mulf %10, %55 : vector<8x128xf32>
    %cst_19 = arith.constant 0.000000e+00 : f32
    %57 = vector.broadcast %cst_19 : f32 to vector<8x128xf32>
    %58 = arith.select %54, %56, %57 : vector<8x128xi1>, vector<8x128xf32>
    %c0_20 = arith.constant 0 : index
    %c0_21 = arith.constant 0 : index
    %59 = vector.load %arg5[%c0_20, %c0_21] : memref<8x128xf32, #tpu.memory_space<vmem>>, vector<8x128xf32>
    tpu.vector_store %arg5[%c0_20, %c0_21], %58 {strides = array<i32>} : memref<8x128xf32, #tpu.memory_space<vmem>>, vector<8x128xf32>,
    return
  }
  func.func @transform_0(%arg0: i32, %arg1: memref<1xi32, #tpu.memory_space<smem>>) -> (i32, i32) {
    %c0_i32 = arith.constant 0 : i32
    %c0_i32_0 = arith.constant 0 : i32
    return %arg0, %c0_i32 : i32, i32
  }
  func.func @transform_1(%arg0: i32, %arg1: memref<1xi32, #tpu.memory_space<smem>>) -> (i32, i32) {
    %c0_i32 = arith.constant 0 : i32
    %c0_i32_0 = arith.constant 0 : i32
    %c0_i32_1 = arith.constant 0 : i32
    return %c0_i32, %c0_i32_0 : i32, i32
  }
  func.func @transform_2(%arg0: i32, %arg1: memref<1xi32, #tpu.memory_space<smem>>) -> (i32, i32) {
    %c0_i32 = arith.constant 0 : i32
    %c0_i32_0 = arith.constant 0 : i32
    %c0_i32_1 = arith.constant 0 : i32
    return %c0_i32, %c0_i32_0 : i32, i32
  }
  func.func @transform_3(%arg0: i32, %arg1: memref<1xi32, #tpu.memory_space<smem>>) -> (i32, i32) {
    %c0_i32 = arith.constant 0 : i32
    %c0_i32_0 = arith.constant 0 : i32
    return %arg0, %c0_i32 : i32, i32
  }
}

</mosaic_0001>

<llo_original>
// kernel: transformer_embedding.1
$region0: #{transformer_embedding.1}
  #allocation0 [shape = 'u32[]', space=smem, size = 0x4, offset = 0x4, fixed_abs, tag = 'smem constant byte address 0x4 - core index']
  #allocation1 [shape = 'u32[72,128]{1,0:T(1,128)}', space=vmem, size = 0x9000, scoped, tag = 'internal scratch']
  #allocation2 [shape = 's32[1]{0}', space=sflag, size = 0x4, scoped, tag = 'scoped memory for transformer_embedding.1']
  #allocation3 [shape = 's32[1]{0:T(128)S(6)}', space=smem, size = 0x200, scoped, tag = 'prefetched SMEM operand 0']
  %s0 = inlined_call_operand.<no memory space> [shape: s32[1], index: 0, kind: input, shape index: {}]
  %s1 = inlined_call_operand.vmem [shape: s32[16,1], index: 1, kind: input, shape index: {}]
  %s2 = inlined_call_operand.hbm [shape: f32[64,128], index: 2, kind: input, shape index: {}]
  %s3 = inlined_call_operand.vmem [shape: f32[8,128], index: 3, kind: input, shape index: {}]
  %s4 = inlined_call_operand.hbm [shape: f32[16,128], index: 4, kind: output, shape index: {}]
  %s5 = sld [smem:[#allocation0]]
  $region49: #{transformer_embedding.1} parent=0
    _
  %s7 = ssub.s32 1, %s5
  %s8 = scalar_select 0, %s7, %s5
  %9 = sst [smem:[#allocation3]] %s0
  $region1: #{transformer_embedding.1} parent=0
    #allocation4 [shape = 'u8[32768]{0}', space=vmem, size = 0x8000, scoped, tag = 'input window, operand 2, single buffered']
    #allocation5 [shape = 's32[2]{0}', space=sflag, size = 0x8, scoped, tag = 'scoped memory for transformer_embedding.1']
    #allocation6 [shape = 's32[2]{0}', space=sflag, size = 0x8, scoped, tag = 'scoped memory for transformer_embedding.1']
    #allocation7 [shape = 'u8[8192]{0}', space=vmem, size = 0x2000, scoped, tag = 'output window, operand 0']
    %10 = vsyncpa [#allocation5], 0
    %11 = vsyncpa [#allocation6], 0
    %s12 = scalar_lea.sflag [#allocation6], 1
    %13 = vsyncpa %s12, 0
    loop: start=0, step=1, limit=4
    $region2: #{transformer_embedding.1} parent=1 // loop_pre_header
      _
    $region3: #{transformer_embedding.1} parent=1 // loop_header
      %s15 = sphi 0, %s19
      %p16 = scmp.ge.s32.totalorder %s15, 4
      %s25 = sphi 0, %s27
      %s28 = sphi 0, %s25
      %s29 = sphi 0, %s28
      %s45 = sphi 0, %s29
      %s49 = sphi 0, %s49
      %s51 = sphi 0, %s49
      %s52 = sphi 0, %s51
      %s66 = sphi 0, %s52
      %s70 = sphi 0, %s70
      %s72 = sphi 0, %s70
      %s73 = sphi 0, %s72
      %s87 = sphi 0, %s73
      %s93 = sphi 0, %s95
      %s96 = sphi 0, %s93
      %s97 = sphi 0, %s96
      %s113 = sphi 0, %s97
    $region4: #{transformer_embedding.1} parent=1 // loop_header_branch
      %18 = sbr.rel (%p16) target = $region8
    $region5: #{transformer_embedding.1} parent=1 // loop_body
      %s20 = ssub.s32 %s15, 1
      %s21 = ssub.s32 %s15, 2
      %s22 = sadd.s32 %s15, 1
      %s23 = ssub.s32 %s15, %s22
      %p24 = scmp.eq.s32.totalorder %s23, 0
      %s26 = sadd.s32 %s25, 1
      %s27 = scalar_select %p24, %s25, %s26
      %p30 = pneg %p24
      %p31 = scmp.eq.s32.totalorder %s15, 1
      %p32 = por %p30, %p31
      %p33 = scmp.ne.s32.totalorder %s25, %s28
      %p34 = scmp.eq.s32.totalorder %s15, 0
      %p35 = por %p33, %p34
      %p36 = scmp.ne.s32.totalorder %s25, %s28
      %p37 = scmp.eq.s32.totalorder %s20, 1
      %p38 = por %p36, %p37
      %p39 = scmp.ne.s32.totalorder %s28, %s29
      %p40 = scmp.eq.s32.totalorder %s20, 0
      %p41 = por %p39, %p40
      %p42 = scmp.ne.s32.totalorder %s28, %s29
      %p43 = scmp.eq.s32.totalorder %s21, 1
      %p44 = por %p42, %p43
      %p46 = scmp.ne.s32.totalorder %s29, %s45
      %p47 = scmp.eq.s32.totalorder %s21, 0
      %p48 = por %p46, %p47
      %s50 = sadd.s32 %s49, 1
      %p53 = scmp.eq.s32.totalorder %s15, 1
      %p54 = scmp.ne.s32.totalorder %s49, %s51
      %p55 = scmp.eq.s32.totalorder %s15, 0
      %p56 = por %p54, %p55
      %p57 = scmp.ne.s32.totalorder %s49, %s51
      %p58 = scmp.eq.s32.totalorder %s20, 1
      %p59 = por %p57, %p58
      %p60 = scmp.ne.s32.totalorder %s51, %s52
      %p61 = scmp.eq.s32.totalorder %s20, 0
      %p62 = por %p60, %p61
      %p63 = scmp.ne.s32.totalorder %s51, %s52
      %p64 = scmp.eq.s32.totalorder %s21, 1
      %p65 = por %p63, %p64
      %p67 = scmp.ne.s32.totalorder %s52, %s66
      %p68 = scmp.eq.s32.totalorder %s21, 0
      %p69 = por %p67, %p68
      %s71 = sadd.s32 %s70, 1
      %p74 = scmp.eq.s32.totalorder %s15, 1
      %p75 = scmp.ne.s32.totalorder %s70, %s72
      %p76 = scmp.eq.s32.totalorder %s15, 0
      %p77 = por %p75, %p76
      %p78 = scmp.ne.s32.totalorder %s70, %s72
      %p79 = scmp.eq.s32.totalorder %s20, 1
      %p80 = por %p78, %p79
      %p81 = scmp.ne.s32.totalorder %s72, %s73
      %p82 = scmp.eq.s32.totalorder %s20, 0
      %p83 = por %p81, %p82
      %p84 = scmp.ne.s32.totalorder %s72, %s73
      %p85 = scmp.eq.s32.totalorder %s21, 1
      %p86 = por %p84, %p85
      %p88 = scmp.ne.s32.totalorder %s73, %s87
      %p89 = scmp.eq.s32.totalorder %s21, 0
      %p90 = por %p88, %p89
      %s91 = ssub.s32 %s15, %s22
      %p92 = scmp.eq.s32.totalorder %s91, 0
      %s94 = sadd.s32 %s93, 1
      %s95 = scalar_select %p92, %s93, %s94
      %p98 = pneg %p92
      %p99 = scmp.eq.s32.totalorder %s15, 1
      %p100 = por %p98, %p99
      %p101 = scmp.ne.s32.totalorder %s93, %s96
      %p102 = scmp.eq.s32.totalorder %s15, 0
      %p103 = por %p101, %p102
      %p104 = scmp.ne.s32.totalorder %s93, %s96
      %p105 = scmp.eq.s32.totalorder %s20, 1
      %p106 = por %p104, %p105
      %p107 = scmp.ne.s32.totalorder %s96, %s97
      %p108 = scmp.eq.s32.totalorder %s20, 0
      %p109 = por %p107, %p108
      %p110 = scmp.ne.s32.totalorder %s96, %s97
      %p111 = scmp.eq.s32.totalorder %s21, 1
      %p112 = por %p110, %p111
      %p114 = scmp.ne.s32.totalorder %s97, %s113
      %p115 = scmp.eq.s32.totalorder %s21, 0
      %p116 = por %p114, %p115
      %p117 = scmp.le.s32.totalorder 1, %s15
      %p118 = scmp.lt.s32.totalorder %s15, 3
      %p119 = pnand %p117, %p118
      %p120 = pneg %p119
      // Predicated region
      $region9: #{transformer_embedding.1} parent=5 // pred_check
        _
      $region10: #{transformer_embedding.1} parent=5 // pred_check_branch
        %122 = sbr.rel (%p119) target = $region12
      $region11: #{transformer_embedding.1} parent=5 // pred_region
        %s123 = ssub.s32 %s15, 1
        // Predicated region
        $region13: #{transformer_embedding.1} parent=11 // pred_check
          %p124 = pneg %p62
        $region14: #{transformer_embedding.1} parent=11 // pred_check_branch
          %126 = sbr.rel (%p124) target = $region16
        $region15: #{transformer_embedding.1} parent=11 // pred_region
          %128 = vsyncadd [#allocation5], 0
          %s129 = sshll.u32 %s2, 4
          %s130 = int_to_ptr.hbm [resolvable:$true] %s129
          %s131 = sshll.u32 [#allocation4], 4
          %s132 = int_to_ptr.vmem [resolvable:$true] %s131
          %137 = dma.hbm_to_vmem [thread:$0]  %s130, 1024, %s132, [#allocation5], 128, 128, 8
        $region16: #{transformer_embedding.1} parent=11 // pred_fallthru
          _
        // Predicated region
        $region17: #{transformer_embedding.1} parent=11 // pred_check
          %p138 = pneg %p83
        $region18: #{transformer_embedding.1} parent=11 // pred_check_branch
          %140 = sbr.rel (%p138) target = $region20
        $region19: #{transformer_embedding.1} parent=11 // pred_region
          _
        $region20: #{transformer_embedding.1} parent=11 // pred_fallthru
          _
      $region12: #{transformer_embedding.1} parent=5 // pred_fallthru
        _
      %p141 = scmp.lt.s32.totalorder %s15, 2
      // Predicated region
      $region21: #{transformer_embedding.1} parent=5 // pred_check
        %p142 = pneg %p141
      $region22: #{transformer_embedding.1} parent=5 // pred_check_branch
        %144 = sbr.rel (%p142) target = $region24
      $region23: #{transformer_embedding.1} parent=5 // pred_region
        // Predicated region
        $region25: #{transformer_embedding.1} parent=23 // pred_check
          %p145 = pneg %p35
        $region26: #{transformer_embedding.1} parent=23 // pred_check_branch
          %147 = sbr.rel (%p145) target = $region28
        $region27: #{transformer_embedding.1} parent=23 // pred_region
          %p148 = scmp.lt.s32.totalorder %s15, 1
          %s149 = scalar_select %p148, %s15, 1
          %s150 = smul.addr %s149, 8
          %s151 = scalar_lea.vmem %s1, %s150
        $region28: #{transformer_embedding.1} parent=23 // pred_fallthru
          _
      $region24: #{transformer_embedding.1} parent=5 // pred_fallthru
        _
      %p152 = scmp.le.s32.totalorder 1, %s15
      %p153 = scmp.lt.s32.totalorder %s15, 3
      %p154 = pnand %p152, %p153
      %p155 = pneg %p154
      // Predicated region
      $region29: #{transformer_embedding.1} parent=5 // pred_check
        _
      $region30: #{transformer_embedding.1} parent=5 // pred_check_branch
        %157 = sbr.rel (%p154) target = $region32
      $region31: #{transformer_embedding.1} parent=5 // pred_region
        %s158 = ssub.s32 %s15, 1
        // Predicated region
        $region33: #{transformer_embedding.1} parent=31 // pred_check
          %p159 = pneg %p62
        $region34: #{transformer_embedding.1} parent=31 // pred_check_branch
          %161 = sbr.rel (%p159) target = $region36
        $region35: #{transformer_embedding.1} parent=31 // pred_region
          %163 = dma.done [#allocation5], 1024
        $region36: #{transformer_embedding.1} parent=31 // pred_fallthru
          _
        %p164 = scmp.lt.s32.totalorder %s20, 1
        %s165 = scalar_select %p164, %s20, 1
        %s166 = smul.addr %s165, 8
        %s167 = scalar_lea.vmem %s1, %s166
        %p168 = pneg %p41
        %p169 = pneg %p38
        %p170 = pneg %p62
        %p171 = pneg %p59
        %p172 = pneg %p83
        %p173 = pneg %p80
        %p174 = pneg %p109
        %p175 = pneg %p106
        %s176 = sand.u32 %s96, 1
        %s177 = scalar_lea.sflag [#allocation6], %s176
        %s178 = sand.u32 %s96, 1
        %s179 = smul.addr %s178, 8
        %s180 = scalar_lea.vmem [#allocation7], %s179
        %p181 = scmp.lt.s32.totalorder %s20, 1
        %s182 = scalar_select %p181, %s20, 1
        %s183 = smul.addr %s182, 8
        %s184 = scalar_lea.vmem %s1, %s183
        %v185 = vld [vmem:[%s184] sm:$0xff]
        %v186 = vlaneseq
        %v187 = vand.u32 %v186, 127
        %188 = vset.pattern.permute.xlu0 0
        %189 = vperm.xlu0 %188, %v185
        %v190 = vpop.permute.xlu0 %189
        %vm191 = vcmp.eq.s32.totalorder %v190, %v187
        %v192 = vsel %vm191, 1.0, 0.0
        %v193 = vld [vmem:[#allocation4] sm:$0xff]
        %v194 = vld [vmem:[#allocation4 + $0x8] sm:$0xff]
        %v195 = vld [vmem:[#allocation4 + $0x10] sm:$0xff]
        %v196 = vld [vmem:[#allocation4 + $0x18] sm:$0xff]
        %v197 = vld [vmem:[#allocation4 + $0x20] sm:$0xff]
        %v198 = vld [vmem:[#allocation4 + $0x28] sm:$0xff]
        %v199 = vld [vmem:[#allocation4 + $0x30] sm:$0xff]
        %v200 = vld [vmem:[#allocation4 + $0x38] sm:$0xff]
        %v201 = vld [vmem:[%s3] sm:$0xff]
        %vm202 = vcmask 523264
        %v204 = vsel %vm202, %v192, 0
        %206 = vmatpush.msra.mxu0 0.0
        %207 = vmatpush.msra.mxu0 0.0
        %208 = vmatpush.msra.mxu0 0.0
        %209 = vmatpush.msra.mxu0 0.0
        %210 = vmatpush.msra.mxu0 0.0
        %211 = vmatpush.msra.mxu0 0.0
        %212 = vmatpush.msra.mxu0 0.0
        %213 = vmatpush.msra.mxu0 0.0
        %214 = vmatpush.msra.mxu0 %v200
        %215 = vmatpush.msra.mxu0 %v199
        %216 = vmatpush.msra.mxu0 %v198
        %217 = vmatpush.msra.mxu0 %v197
        %218 = vmatpush.msra.mxu0 %v196
        %219 = vmatpush.msra.mxu0 %v195
        %220 = vmatpush.msra.mxu0 %v194
        %221 = vmatpush.msra.mxu0 %v193
        %222 = vmatmul.f32.gmra.mxu0 %v204
        %v223 = vpop.f32.mrf.mxu0
        %v224 = vadd.f32 %v201, %v223
        %225 = vdwg.mxu0
        %s226 = sld [smem:[#allocation3]]
        %s227 = smul.u32 %s226, 2654435761
        %s228 = sshra.s32 %s227, 16
        %s229 = sand.u32 %s228, 65535
        %s230 = sxor.u32 %s227, %s229
        %s231 = smul.u32 %s230, 2246822507
        %s232 = sshra.s32 %s231, 13
        %s233 = sand.u32 %s232, 524287
        %s234 = sxor.u32 %s231, %s233
        %s235 = smul.u32 %s234, 3266489909
        %s236 = sshra.s32 %s235, 16
        %s237 = sand.u32 %s236, 65535
        %s238 = sxor.u32 %s235, %s237
        %v239 = vlaneseq
        %v240 = vshrl.u32 %v239, 7
        %s241 = smul.u32 %s20, 8
        %v242 = vstv %s241
        %v243 = vadd.s32 %v240, %v242
        %v244 = vmul.u32 %v243, 128
        %v245 = vadd.s32 %v244, %v187
        %v246 = vstv %s238
        %v247 = vxor.u32 %v245, %v246
        %v248 = vshra.s32 %v247, 16
        %v249 = vand.u32 %v248, 65535
        %v250 = vxor.u32 %v247, %v249
        %v251 = vmul.u32 %v250, 2246822507
        %v252 = vshra.s32 %v251, 13
        %v253 = vand.u32 %v252, 524287
        %v254 = vxor.u32 %v251, %v253
        %v255 = vmul.u32 %v254, 3266489909
        %v256 = vshra.s32 %v255, 16
        %v257 = vand.u32 %v256, 65535
        %v258 = vxor.u32 %v255, %v257
        %vm259 = vcmp.ge.s32.totalorder %v258, 2576980378
        %v260 = vmul.f32 %v224, 1.1111112
        %v261 = vsel %vm259, %v260, 0.0
        %262 = vst [vmem:[%s180] sm:$0xff] %v261
        %s263 = sand.u32 %s96, 1
        %s264 = scalar_lea.sflag [#allocation6], %s263
        %s265 = sand.u32 %s96, 1
        %s266 = smul.addr %s265, 8
        %s267 = scalar_lea.vmem [#allocation7], %s266
        // Predicated region
        $region37: #{transformer_embedding.1} parent=31 // pred_check
          %p268 = pneg %p106
        $region38: #{transformer_embedding.1} parent=31 // pred_check_branch
          %270 = sbr.rel (%p268) target = $region40
        $region39: #{transformer_embedding.1} parent=31 // pred_region
          %272 = vsyncadd %s264, 0
          %s273 = smul.addr %s20, 8
          %s274 = scalar_lea.hbm %s4, %s273
          %s276 = sshll.u32 %s267, 4
          %s277 = int_to_ptr.vmem [resolvable:$true] %s276
          %s278 = sshll.u32 %s274, 4
          %s279 = int_to_ptr.hbm [resolvable:$true] %s278
          %281 = dma.vmem_to_hbm [thread:$0]  %s277, 128, %s279, %s264
        $region40: #{transformer_embedding.1} parent=31 // pred_fallthru
          _
      $region32: #{transformer_embedding.1} parent=5 // pred_fallthru
        _
      %p282 = scmp.le.s32.totalorder 2, %s15
      // Predicated region
      $region41: #{transformer_embedding.1} parent=5 // pred_check
        %p283 = pneg %p282
      $region42: #{transformer_embedding.1} parent=5 // pred_check_branch
        %285 = sbr.rel (%p283) target = $region44
      $region43: #{transformer_embedding.1} parent=5 // pred_region
        %s286 = ssub.s32 %s15, 2
        // Predicated region
        $region45: #{transformer_embedding.1} parent=43 // pred_check
          %p287 = pneg %p112
        $region46: #{transformer_embedding.1} parent=43 // pred_check_branch
          %289 = sbr.rel (%p287) target = $region48
        $region47: #{transformer_embedding.1} parent=43 // pred_region
          %s290 = sand.u32 %s97, 1
          %s291 = scalar_lea.sflag [#allocation6], %s290
          %s292 = sand.u32 %s97, 1
          %s293 = smul.addr %s292, 8
          %s294 = scalar_lea.vmem [#allocation7], %s293
          %296 = dma.done %s291, 128
        $region48: #{transformer_embedding.1} parent=43 // pred_fallthru
          _
      $region44: #{transformer_embedding.1} parent=5 // pred_fallthru
        _
    $region6: #{transformer_embedding.1} parent=1 // loop_footer
      %s19 = sadd.s32 1, %s15
    $region7: #{transformer_embedding.1} parent=1 // loop_footer_branch
      %14 = sbr.rel target = $region3
    $region8: #{transformer_embedding.1} parent=1 // loop_exit
      _
    %297 = vsyncpa [#allocation5], 1
    %s298 = scalar_lea.sflag [#allocation5], 1
    %299 = vsyncpa %s298, 1
    %300 = vsyncpa [#allocation6], 1
    %s301 = scalar_lea.sflag [#allocation6], 1
    %302 = vsyncpa %s301, 1

</llo_original>
